<compile_context>
chip_gen: v5e
topology: v5e:2x2
jax: 0.10.0
libtpu: 0.0.40
codegen_flags: <defaults>
</compile_context>

<pallas_src>
import numpy as np
import jax
import jax.numpy as jnp
from jax import lax
from jax.experimental import pallas as pl
from jax.experimental.pallas import tpu as pltpu

NB_INPUT = 15      # L
BATCH = 8          # B
BN_EPS = 1e-5

PAD_IN = 128       # 1 * 15  -> 128
PAD_C5 = 128       # 5 * 15  -> 128
PAD_C10 = 256      # 10 * 15 -> 256
PAD_OUT = 128      # 1       -> 128 (lane-dense output store; col 0 holds the result)


# ----------------------------------------------------------------------------
# Host-side glue: lower Conv1d('same') to dense matrices, build BN helpers.
# ----------------------------------------------------------------------------
def conv1d_to_matrix(w, L):
    """w: (Cout, Cin, K) -> M: (Cin*L, Cout*L) so y_flat = x_flat @ M ('same' pad)."""
    Cout, Cin, K = w.shape
    pad = K // 2
    M = np.zeros((Cin * L, Cout * L), dtype=np.float32)
    for co in range(Cout):
        for ci in range(Cin):
            for l in range(L):
                for k in range(K):
                    j = l + k - pad
                    if 0 <= j < L:
                        M[ci * L + j, co * L + l] = w[co, ci, k]
    return M


def bn_block_diag(C, L, width):
    """(width, width) 0/1 matrix: R[i, j] = 1 iff columns i, j belong to the same channel."""
    R = np.zeros((width, width), dtype=np.float32)
    for c in range(C):
        R[c * L:(c + 1) * L, c * L:(c + 1) * L] = 1.0
    return R


def expand_per_channel(v, L, width):
    """Per-channel vector (C,) -> per-column vector (width,), zero on padded lanes."""
    out = np.zeros((width,), dtype=np.float32)
    v = np.asarray(v, np.float32)
    out[:v.shape[0] * L] = np.repeat(v, L)
    return out


# ----------------------------------------------------------------------------
# Pallas kernel: whole (tiny) network in one invocation, everything in VMEM.
# ----------------------------------------------------------------------------
def _conv_relu_bn(h, M, bias, gamma, beta, R, inv_n):
    """h: (B, CLin) f32, M: (CLin, CLout) bf16, bias/gamma/beta: (1, CLout) f32,
    R: (CLout, CLout) f32 per-channel repeat matrix. Returns (B, CLout) f32."""
    # Conv1d as bf16 MXU matmul (f32 accumulate), bias, ReLU.
    y = jnp.dot(h.astype(jnp.bfloat16), M, preferred_element_type=jnp.float32)
    y = jnp.maximum(y + bias, 0.0)
    # Training-mode BatchNorm1d: per-channel moments over (batch, length),
    # both moments produced by a single (2, CL) x (CL, CL) matmul.
    stats = jnp.concatenate(
        [jnp.sum(y, axis=0, keepdims=True),
         jnp.sum(y * y, axis=0, keepdims=True)], axis=0) * inv_n      # (2, CLout)
    mom = jnp.dot(stats, R, preferred_element_type=jnp.float32)       # [mean; E[x^2]] per col
    mean = mom[0:1, :]
    var = mom[1:2, :] - mean * mean                                   # biased var (PyTorch norm.)
    scale = gamma * lax.rsqrt(var + BN_EPS)                           # 0 on padded lanes
    shift = beta - mean * scale
    return y * scale + shift


def mycnn_kernel(x_ref, w_ref, r_ref, v_ref, out_ref):
    inv_n = 1.0 / (x_ref.shape[0] * NB_INPUT)   # BN averages over (batch, length)
    h = x_ref[...]                                                    # (B, 128) f32

    # Conv1d(1 -> 5, k=7, pad=3) + ReLU + BatchNorm1d(5)
    h = _conv_relu_bn(h, w_ref[0:128, 0:128],
                      v_ref[0:1, 0:128], v_ref[1:2, 0:128], v_ref[2:3, 0:128],
                      r_ref[0:128, 0:128], inv_n)                     # (B, 128)
    # Conv1d(5 -> 10) + ReLU + BatchNorm1d(10)
    h = _conv_relu_bn(h, w_ref[128:256, 0:256],
                      v_ref[3:4, 0:256], v_ref[4:5, 0:256], v_ref[5:6, 0:256],
                      r_ref[128:384, 0:256], inv_n)                   # (B, 256)
    # Conv1d(10 -> 5) + ReLU + BatchNorm1d(5)
    h = _conv_relu_bn(h, w_ref[256:512, 0:128],
                      v_ref[6:7, 0:128], v_ref[7:8, 0:128], v_ref[8:9, 0:128],
                      r_ref[384:512, 0:128], inv_n)                   # (B, 128)

    # Flatten is a no-op in this layout; Linear(5*L -> 1), lane-padded to 128 columns
    # (only column 0 of the weight/bias is non-zero, so out[:, 0] is the result).
    out_ref[...] = (jnp.dot(h.astype(jnp.bfloat16), w_ref[512:640, 0:128],
                            preferred_element_type=jnp.float32)
                    + v_ref[9:10, 0:128])


def mycnn_forward(x, params):
    """x: (B, nbInput) float32 -> (B, 1) float32."""
    w_slab, r_slab, v_slab = params
    B = x.shape[0]
    # Lane-pad the input once in the wrapper (layout plumbing, not compute).
    x_pad = jnp.pad(x.astype(jnp.float32), ((0, 0), (0, PAD_IN - x.shape[1])))

    flops = (2 * B * (128 * 128 + 128 * 256 + 256 * 128 + 128 * 128)
             + 2 * 2 * (128 * 128 + 256 * 256 + 128 * 128))
    bytes_accessed = int(x_pad.size * 4 + w_slab.size * 2 + r_slab.size * 4
                         + v_slab.size * 4 + B * PAD_OUT * 4)

    vmem = pl.BlockSpec(memory_space=pltpu.MemorySpace.VMEM)
    out = pl.pallas_call(
        mycnn_kernel,
        out_shape=jax.ShapeDtypeStruct((B, PAD_OUT), jnp.float32),
        in_specs=[vmem, vmem, vmem, vmem],
        out_specs=vmem,
        cost_estimate=pl.CostEstimate(flops=flops, transcendentals=512,
                                      bytes_accessed=bytes_accessed),
    )(x_pad, w_slab, r_slab, v_slab)
    return out[:, :1]


# ----------------------------------------------------------------------------
# Deterministic parameter construction packed into 3 lane-dense slabs.
# ----------------------------------------------------------------------------
def make_params(L=NB_INPUT):
    key = jax.random.PRNGKey(0)
    ks = jax.random.split(key, 8)

    def rnd(k, shape, scale):
        return np.asarray(jax.random.normal(k, shape, dtype=jnp.float32)) * scale

    # Synthetic weights matching the module's shapes.
    w1 = rnd(ks[0], (5, 1, 7), 0.3);   b1 = rnd(ks[1], (5,), 0.1)
    w2 = rnd(ks[2], (10, 5, 7), 0.15); b2 = rnd(ks[3], (10,), 0.1)
    w3 = rnd(ks[4], (5, 10, 7), 0.1);  b3 = rnd(ks[5], (5,), 0.1)
    g1, bt1 = np.ones(5, np.float32), np.zeros(5, np.float32)
    g2, bt2 = np.ones(10, np.float32), np.zeros(10, np.float32)
    g3, bt3 = np.ones(5, np.float32), np.zeros(5, np.float32)
    wl = rnd(ks[6], (1, 5 * L), 0.05); bl = rnd(ks[7], (1,), 0.1)

    # ---- weight slab (bf16): conv-as-matmul matrices + final Linear ----
    W = np.zeros((640, 256), np.float32)
    W[0:1 * L,          0:5 * L]  = conv1d_to_matrix(w1, L)   # (15, 75)  in (128, 128) band
    W[128:128 + 5 * L,  0:10 * L] = conv1d_to_matrix(w2, L)   # (75, 150) in (128, 256) band
    W[256:256 + 10 * L, 0:5 * L]  = conv1d_to_matrix(w3, L)   # (150, 75) in (256, 128) band
    W[512:512 + 5 * L,  0]        = wl[0, :]                  # Linear weight -> column 0

    # ---- BN repeat-matrix slab (f32) ----
    R = np.zeros((512, 256), np.float32)
    R[0:128,   0:128] = bn_block_diag(5, L, 128)
    R[128:384, 0:256] = bn_block_diag(10, L, 256)
    R[384:512, 0:128] = bn_block_diag(5, L, 128)

    # ---- row-vector slab (f32): biases + BN gamma/beta, expanded per column ----
    V = np.zeros((16, 256), np.float32)
    V[0, :128] = expand_per_channel(b1, L, 128)
    V[1, :128] = expand_per_channel(g1, L, 128)
    V[2, :128] = expand_per_channel(bt1, L, 128)
    V[3, :256] = expand_per_channel(b2, L, 256)
    V[4, :256] = expand_per_channel(g2, L, 256)
    V[5, :256] = expand_per_channel(bt2, L, 256)
    V[6, :128] = expand_per_channel(b3, L, 128)
    V[7, :128] = expand_per_channel(g3, L, 128)
    V[8, :128] = expand_per_channel(bt3, L, 128)
    V[9, 0] = bl[0]

    return (jnp.asarray(W, dtype=jnp.bfloat16),
            jnp.asarray(R, dtype=jnp.float32),
            jnp.asarray(V, dtype=jnp.float32))


if __name__ == "__main__":
    params = make_params(NB_INPUT)
    x = jax.random.normal(jax.random.PRNGKey(0), (BATCH, NB_INPUT), dtype=jnp.float32)
    out = mycnn_forward(x, params)
    out = jax.block_until_ready(out)
    assert out.shape == (BATCH, 1) and out.dtype == jnp.float32
    assert bool(jnp.all(jnp.isfinite(out)))
    print("KERNEL_OK")
</pallas_src>

<mosaic_0001>
module attributes {stable_mosaic.version = 11 : i64} {
  func.func @mycnn_kernel(%arg0: memref<8x128xf32, #tpu.memory_space<vmem>>, %arg1: memref<640x256xbf16, #tpu.memory_space<vmem>>, %arg2: memref<512x256xf32, #tpu.memory_space<vmem>>, %arg3: memref<16x256xf32, #tpu.memory_space<vmem>>, %arg4: memref<8x128xf32, #tpu.memory_space<vmem>>) attributes {dimension_semantics = [], scalar_prefetch = 0 : i64, scratch_operands = 0 : i64, tpu.core_type = #tpu.core_type<tc>} {
    %c0 = arith.constant 0 : index
    %c0_0 = arith.constant 0 : index
    %0 = vector.load %arg0[%c0, %c0_0] : memref<8x128xf32, #tpu.memory_space<vmem>>, vector<8x128xf32>
    %c0_1 = arith.constant 0 : index
    %c0_2 = arith.constant 0 : index
    %1 = vector.load %arg1[%c0_1, %c0_2] : memref<640x256xbf16, #tpu.memory_space<vmem>>, vector<128x128xbf16>
    %c0_3 = arith.constant 0 : index
    %c0_4 = arith.constant 0 : index
    %2 = vector.load %arg3[%c0_3, %c0_4] : memref<16x256xf32, #tpu.memory_space<vmem>>, vector<1x128xf32>
    %c1 = arith.constant 1 : index
    %c0_5 = arith.constant 0 : index
    %3 = vector.load %arg3[%c1, %c0_5] : memref<16x256xf32, #tpu.memory_space<vmem>>, vector<1x128xf32>
    %c2 = arith.constant 2 : index
    %c0_6 = arith.constant 0 : index
    %4 = vector.load %arg3[%c2, %c0_6] : memref<16x256xf32, #tpu.memory_space<vmem>>, vector<1x128xf32>
    %c0_7 = arith.constant 0 : index
    %c0_8 = arith.constant 0 : index
    %5 = vector.load %arg2[%c0_7, %c0_8] : memref<512x256xf32, #tpu.memory_space<vmem>>, vector<128x128xf32>
    %6 = arith.truncf %0 : vector<8x128xf32> to vector<8x128xbf16>
    %cst = arith.constant dense<0.000000e+00> : vector<8x128xf32>
    %7 = tpu.matmul %6, %1, %cst {dimension_numbers = #tpu.dot_dimension_numbers<[1], [0], [0], [1], [0, 0, 1, 1], [], []>} : vector<8x128xbf16>, vector<128x128xbf16>, vector<8x128xf32> -> vector<8x128xf32>
    %8 = vector.broadcast %2 : vector<1x128xf32> to vector<8x128xf32>
    %9 = arith.addf %7, %8 : vector<8x128xf32>
    %cst_9 = arith.constant 0.000000e+00 : f32
    %10 = vector.broadcast %cst_9 : f32 to vector<8x128xf32>
    %11 = arith.maximumf %9, %10 : vector<8x128xf32>
    %cst_10 = arith.constant dense<0.000000e+00> : vector<128xf32>
    %12 = vector.multi_reduction <add>, %11, %cst_10 [0] : vector<8x128xf32> to vector<128xf32>
    %13 = vector.shape_cast %12 : vector<128xf32> to vector<1x128xf32>
    %14 = arith.mulf %11, %11 : vector<8x128xf32>
    %cst_11 = arith.constant dense<0.000000e+00> : vector<128xf32>
    %15 = vector.multi_reduction <add>, %14, %cst_11 [0] : vector<8x128xf32> to vector<128xf32>
    %16 = vector.shape_cast %15 : vector<128xf32> to vector<1x128xf32>
    %17 = tpu.concatenate %13, %16 in 0 : vector<1x128xf32>, vector<1x128xf32> -> vector<2x128xf32>
    %cst_12 = arith.constant 0.00833333377 : f32
    %18 = vector.broadcast %cst_12 : f32 to vector<2x128xf32>
    %19 = arith.mulf %17, %18 : vector<2x128xf32>
    %cst_13 = arith.constant dense<0.000000e+00> : vector<2x128xf32>
    %20 = tpu.matmul %19, %5, %cst_13 {dimension_numbers = #tpu.dot_dimension_numbers<[1], [0], [0], [1], [0, 0, 1, 1], [], []>} : vector<2x128xf32>, vector<128x128xf32>, vector<2x128xf32> -> vector<2x128xf32>
    %21 = vector.extract_strided_slice %20 {offsets = [0, 0], sizes = [1, 128], strides = [1, 1]} : vector<2x128xf32> to vector<1x128xf32>
    %22 = vector.extract_strided_slice %20 {offsets = [1, 0], sizes = [1, 128], strides = [1, 1]} : vector<2x128xf32> to vector<1x128xf32>
    %23 = arith.mulf %21, %21 : vector<1x128xf32>
    %24 = arith.subf %22, %23 : vector<1x128xf32>
    %cst_14 = arith.constant 9.99999974E-6 : f32
    %25 = vector.broadcast %cst_14 : f32 to vector<1x128xf32>
    %26 = arith.addf %24, %25 : vector<1x128xf32>
    %27 = math.rsqrt %26 : vector<1x128xf32>
    %28 = arith.mulf %3, %27 : vector<1x128xf32>
    %29 = arith.mulf %21, %28 : vector<1x128xf32>
    %30 = arith.subf %4, %29 : vector<1x128xf32>
    %31 = vector.broadcast %28 : vector<1x128xf32> to vector<8x128xf32>
    %32 = arith.mulf %11, %31 : vector<8x128xf32>
    %33 = vector.broadcast %30 : vector<1x128xf32> to vector<8x128xf32>
    %34 = arith.addf %32, %33 : vector<8x128xf32>
    %c128 = arith.constant 128 : index
    %c0_15 = arith.constant 0 : index
    %35 = vector.load %arg1[%c128, %c0_15] : memref<640x256xbf16, #tpu.memory_space<vmem>>, vector<128x256xbf16>
    %c3 = arith.constant 3 : index
    %c0_16 = arith.constant 0 : index
    %36 = vector.load %arg3[%c3, %c0_16] : memref<16x256xf32, #tpu.memory_space<vmem>>, vector<1x256xf32>
    %c4 = arith.constant 4 : index
    %c0_17 = arith.constant 0 : index
    %37 = vector.load %arg3[%c4, %c0_17] : memref<16x256xf32, #tpu.memory_space<vmem>>, vector<1x256xf32>
    %c5 = arith.constant 5 : index
    %c0_18 = arith.constant 0 : index
    %38 = vector.load %arg3[%c5, %c0_18] : memref<16x256xf32, #tpu.memory_space<vmem>>, vector<1x256xf32>
    %c128_19 = arith.constant 128 : index
    %c0_20 = arith.constant 0 : index
    %39 = vector.load %arg2[%c128_19, %c0_20] : memref<512x256xf32, #tpu.memory_space<vmem>>, vector<256x256xf32>
    %40 = arith.truncf %34 : vector<8x128xf32> to vector<8x128xbf16>
    %cst_21 = arith.constant dense<0.000000e+00> : vector<8x256xf32>
    %41 = tpu.matmul %40, %35, %cst_21 {dimension_numbers = #tpu.dot_dimension_numbers<[1], [0], [0], [1], [0, 0, 1, 1], [], []>} : vector<8x128xbf16>, vector<128x256xbf16>, vector<8x256xf32> -> vector<8x256xf32>
    %42 = vector.broadcast %36 : vector<1x256xf32> to vector<8x256xf32>
    %43 = arith.addf %41, %42 : vector<8x256xf32>
    %cst_22 = arith.constant 0.000000e+00 : f32
    %44 = vector.broadcast %cst_22 : f32 to vector<8x256xf32>
    %45 = arith.maximumf %43, %44 : vector<8x256xf32>
    %cst_23 = arith.constant dense<0.000000e+00> : vector<256xf32>
    %46 = vector.multi_reduction <add>, %45, %cst_23 [0] : vector<8x256xf32> to vector<256xf32>
    %47 = vector.shape_cast %46 : vector<256xf32> to vector<1x256xf32>
    %48 = arith.mulf %45, %45 : vector<8x256xf32>
    %cst_24 = arith.constant dense<0.000000e+00> : vector<256xf32>
    %49 = vector.multi_reduction <add>, %48, %cst_24 [0] : vector<8x256xf32> to vector<256xf32>
    %50 = vector.shape_cast %49 : vector<256xf32> to vector<1x256xf32>
    %51 = tpu.concatenate %47, %50 in 0 : vector<1x256xf32>, vector<1x256xf32> -> vector<2x256xf32>
    %cst_25 = arith.constant 0.00833333377 : f32
    %52 = vector.broadcast %cst_25 : f32 to vector<2x256xf32>
    %53 = arith.mulf %51, %52 : vector<2x256xf32>
    %cst_26 = arith.constant dense<0.000000e+00> : vector<2x256xf32>
    %54 = tpu.matmul %53, %39, %cst_26 {dimension_numbers = #tpu.dot_dimension_numbers<[1], [0], [0], [1], [0, 0, 1, 1], [], []>} : vector<2x256xf32>, vector<256x256xf32>, vector<2x256xf32> -> vector<2x256xf32>
    %55 = vector.extract_strided_slice %54 {offsets = [0, 0], sizes = [1, 256], strides = [1, 1]} : vector<2x256xf32> to vector<1x256xf32>
    %56 = vector.extract_strided_slice %54 {offsets = [1, 0], sizes = [1, 256], strides = [1, 1]} : vector<2x256xf32> to vector<1x256xf32>
    %57 = arith.mulf %55, %55 : vector<1x256xf32>
    %58 = arith.subf %56, %57 : vector<1x256xf32>
    %cst_27 = arith.constant 9.99999974E-6 : f32
    %59 = vector.broadcast %cst_27 : f32 to vector<1x256xf32>
    %60 = arith.addf %58, %59 : vector<1x256xf32>
    %61 = math.rsqrt %60 : vector<1x256xf32>
    %62 = arith.mulf %37, %61 : vector<1x256xf32>
    %63 = arith.mulf %55, %62 : vector<1x256xf32>
    %64 = arith.subf %38, %63 : vector<1x256xf32>
    %65 = vector.broadcast %62 : vector<1x256xf32> to vector<8x256xf32>
    %66 = arith.mulf %45, %65 : vector<8x256xf32>
    %67 = vector.broadcast %64 : vector<1x256xf32> to vector<8x256xf32>
    %68 = arith.addf %66, %67 : vector<8x256xf32>
    %c256 = arith.constant 256 : index
    %c0_28 = arith.constant 0 : index
    %69 = vector.load %arg1[%c256, %c0_28] : memref<640x256xbf16, #tpu.memory_space<vmem>>, vector<256x128xbf16>
    %c6 = arith.constant 6 : index
    %c0_29 = arith.constant 0 : index
    %70 = vector.load %arg3[%c6, %c0_29] : memref<16x256xf32, #tpu.memory_space<vmem>>, vector<1x128xf32>
    %c7 = arith.constant 7 : index
    %c0_30 = arith.constant 0 : index
    %71 = vector.load %arg3[%c7, %c0_30] : memref<16x256xf32, #tpu.memory_space<vmem>>, vector<1x128xf32>
    %c8 = arith.constant 8 : index
    %c0_31 = arith.constant 0 : index
    %72 = vector.load %arg3[%c8, %c0_31] : memref<16x256xf32, #tpu.memory_space<vmem>>, vector<1x128xf32>
    %c384 = arith.constant 384 : index
    %c0_32 = arith.constant 0 : index
    %73 = vector.load %arg2[%c384, %c0_32] : memref<512x256xf32, #tpu.memory_space<vmem>>, vector<128x128xf32>
    %74 = arith.truncf %68 : vector<8x256xf32> to vector<8x256xbf16>
    %cst_33 = arith.constant dense<0.000000e+00> : vector<8x128xf32>
    %75 = tpu.matmul %74, %69, %cst_33 {dimension_numbers = #tpu.dot_dimension_numbers<[1], [0], [0], [1], [0, 0, 1, 1], [], []>} : vector<8x256xbf16>, vector<256x128xbf16>, vector<8x128xf32> -> vector<8x128xf32>
    %76 = vector.broadcast %70 : vector<1x128xf32> to vector<8x128xf32>
    %77 = arith.addf %75, %76 : vector<8x128xf32>
    %cst_34 = arith.constant 0.000000e+00 : f32
    %78 = vector.broadcast %cst_34 : f32 to vector<8x128xf32>
    %79 = arith.maximumf %77, %78 : vector<8x128xf32>
    %cst_35 = arith.constant dense<0.000000e+00> : vector<128xf32>
    %80 = vector.multi_reduction <add>, %79, %cst_35 [0] : vector<8x128xf32> to vector<128xf32>
    %81 = vector.shape_cast %80 : vector<128xf32> to vector<1x128xf32>
    %82 = arith.mulf %79, %79 : vector<8x128xf32>
    %cst_36 = arith.constant dense<0.000000e+00> : vector<128xf32>
    %83 = vector.multi_reduction <add>, %82, %cst_36 [0] : vector<8x128xf32> to vector<128xf32>
    %84 = vector.shape_cast %83 : vector<128xf32> to vector<1x128xf32>
    %85 = tpu.concatenate %81, %84 in 0 : vector<1x128xf32>, vector<1x128xf32> -> vector<2x128xf32>
    %cst_37 = arith.constant 0.00833333377 : f32
    %86 = vector.broadcast %cst_37 : f32 to vector<2x128xf32>
    %87 = arith.mulf %85, %86 : vector<2x128xf32>
    %cst_38 = arith.constant dense<0.000000e+00> : vector<2x128xf32>
    %88 = tpu.matmul %87, %73, %cst_38 {dimension_numbers = #tpu.dot_dimension_numbers<[1], [0], [0], [1], [0, 0, 1, 1], [], []>} : vector<2x128xf32>, vector<128x128xf32>, vector<2x128xf32> -> vector<2x128xf32>
    %89 = vector.extract_strided_slice %88 {offsets = [0, 0], sizes = [1, 128], strides = [1, 1]} : vector<2x128xf32> to vector<1x128xf32>
    %90 = vector.extract_strided_slice %88 {offsets = [1, 0], sizes = [1, 128], strides = [1, 1]} : vector<2x128xf32> to vector<1x128xf32>
    %91 = arith.mulf %89, %89 : vector<1x128xf32>
    %92 = arith.subf %90, %91 : vector<1x128xf32>
    %cst_39 = arith.constant 9.99999974E-6 : f32
    %93 = vector.broadcast %cst_39 : f32 to vector<1x128xf32>
    %94 = arith.addf %92, %93 : vector<1x128xf32>
    %95 = math.rsqrt %94 : vector<1x128xf32>
    %96 = arith.mulf %71, %95 : vector<1x128xf32>
    %97 = arith.mulf %89, %96 : vector<1x128xf32>
    %98 = arith.subf %72, %97 : vector<1x128xf32>
    %99 = vector.broadcast %96 : vector<1x128xf32> to vector<8x128xf32>
    %100 = arith.mulf %79, %99 : vector<8x128xf32>
    %101 = vector.broadcast %98 : vector<1x128xf32> to vector<8x128xf32>
    %102 = arith.addf %100, %101 : vector<8x128xf32>
    %103 = arith.truncf %102 : vector<8x128xf32> to vector<8x128xbf16>
    %c512 = arith.constant 512 : index
    %c0_40 = arith.constant 0 : index
    %104 = vector.load %arg1[%c512, %c0_40] : memref<640x256xbf16, #tpu.memory_space<vmem>>, vector<128x128xbf16>
    %cst_41 = arith.constant dense<0.000000e+00> : vector<8x128xf32>
    %105 = tpu.matmul %103, %104, %cst_41 {dimension_numbers = #tpu.dot_dimension_numbers<[1], [0], [0], [1], [0, 0, 1, 1], [], []>} : vector<8x128xbf16>, vector<128x128xbf16>, vector<8x128xf32> -> vector<8x128xf32>
    %c9 = arith.constant 9 : index
    %c0_42 = arith.constant 0 : index
    %106 = vector.load %arg3[%c9, %c0_42] : memref<16x256xf32, #tpu.memory_space<vmem>>, vector<1x128xf32>
    %107 = vector.broadcast %106 : vector<1x128xf32> to vector<8x128xf32>
    %108 = arith.addf %105, %107 : vector<8x128xf32>
    %c0_43 = arith.constant 0 : index
    %c0_44 = arith.constant 0 : index
    %109 = vector.load %arg4[%c0_43, %c0_44] : memref<8x128xf32, #tpu.memory_space<vmem>>, vector<8x128xf32>
    tpu.vector_store %arg4[%c0_43, %c0_44], %108 {strides = array<i32>} : memref<8x128xf32, #tpu.memory_space<vmem>>, vector<8x128xf32>,
    return
  }
}

</mosaic_0001>

<llo_original>
// kernel: tpu_custom_call.1
$region0: #{tpu_custom_call.1}
  #allocation0 [shape = 'u32[]', space=smem, size = 0x4, offset = 0x4, fixed_abs, tag = 'smem constant byte address 0x4 - core index']
  #allocation1 [shape = 'u32[72,128]{1,0:T(1,128)}', space=vmem, size = 0x9000, scoped, tag = 'internal scratch']
  %s0 = inlined_call_operand.hbm [shape: f32[8,128], index: 0, kind: input, shape index: {}]
  %s1 = inlined_call_operand.hbm [shape: bf16[640,256], index: 1, kind: input, shape index: {}]
  %s2 = inlined_call_operand.hbm [shape: f32[512,256], index: 2, kind: input, shape index: {}]
  %s3 = inlined_call_operand.hbm [shape: f32[16,256], index: 3, kind: input, shape index: {}]
  %s4 = inlined_call_operand.hbm [shape: f32[8,128], index: 4, kind: output, shape index: {}]
  %s5 = sld [smem:[#allocation0]]
  $region42: #{tpu_custom_call.1} parent=0
    _
  %s7 = ssub.s32 1, %s5
  %s8 = scalar_select 0, %s7, %s5
  $region1: #{tpu_custom_call.1} parent=0
    #allocation2 [shape = 'u8[4096]{0}', space=vmem, size = 0x1000, scoped, tag = 'input window, operand 0, single buffered']
    #allocation3 [shape = 's32[1]{0}', space=sflag, size = 0x4, scoped, tag = 'scoped memory for tpu_custom_call.1']
    #allocation4 [shape = 's32[1]{0}', space=sflag, size = 0x4, scoped, tag = 'scoped memory for tpu_custom_call.1']
    #allocation5 [shape = 'u8[327680]{0}', space=vmem, size = 0x50000, scoped, tag = 'input window, operand 1, single buffered']
    #allocation6 [shape = 's32[1]{0}', space=sflag, size = 0x4, scoped, tag = 'scoped memory for tpu_custom_call.1']
    #allocation7 [shape = 'u8[524288]{0}', space=vmem, size = 0x80000, scoped, tag = 'input window, operand 2, single buffered']
    #allocation8 [shape = 'u8[16384]{0}', space=vmem, size = 0x4000, scoped, tag = 'input window, operand 3, single buffered']
    #allocation9 [shape = 's32[1]{0}', space=sflag, size = 0x4, scoped, tag = 'scoped memory for tpu_custom_call.1']
    #allocation10 [shape = 'u8[4096]{0}', space=vmem, size = 0x1000, scoped, tag = 'output window, operand 0, single buffered']
    %9 = vsyncpa [#allocation3], 0
    %10 = vsyncpa [#allocation6], 0
    %11 = vsyncpa [#allocation9], 0
    %12 = vsyncpa [#allocation4], 0
    // Predicated region
    $region2: #{tpu_custom_call.1} parent=1 // pred_check
      _
    $region3: #{tpu_custom_call.1} parent=1 // pred_check_branch
      %14 = sbr.rel (0) target = $region5
    $region4: #{tpu_custom_call.1} parent=1 // pred_region
      %16 = vsyncadd [#allocation3], 0
      %s18 = sshll.u32 %s0, 4
      %s19 = int_to_ptr.hbm [resolvable:$true] %s18
      %s20 = sshll.u32 [#allocation2], 4
      %s21 = int_to_ptr.vmem [resolvable:$true] %s20
      %23 = dma.hbm_to_vmem [thread:$0]  %s19, 128, %s21, [#allocation3]
    $region5: #{tpu_custom_call.1} parent=1 // pred_fallthru
      _
    // Predicated region
    $region6: #{tpu_custom_call.1} parent=1 // pred_check
      _
    $region7: #{tpu_custom_call.1} parent=1 // pred_check_branch
      %25 = sbr.rel (0) target = $region9
    $region8: #{tpu_custom_call.1} parent=1 // pred_region
      %27 = vsyncadd [#allocation6], 0
      %s28 = sshll.u32 %s1, 4
      %s29 = int_to_ptr.hbm [resolvable:$true] %s28
      %s30 = sshll.u32 [#allocation5], 4
      %s31 = int_to_ptr.vmem [resolvable:$true] %s30
      %36 = dma.hbm_to_vmem [thread:$0]  %s29, 10240, %s31, [#allocation6], 128, 128, 8
    $region9: #{tpu_custom_call.1} parent=1 // pred_fallthru
      _
    // Predicated region
    $region10: #{tpu_custom_call.1} parent=1 // pred_check
      _
    $region11: #{tpu_custom_call.1} parent=1 // pred_check_branch
      %38 = sbr.rel (0) target = $region13
    $region12: #{tpu_custom_call.1} parent=1 // pred_region
      %40 = vsyncadd [#allocation6], 0
      %s41 = sshll.u32 %s2, 4
      %s42 = int_to_ptr.hbm [resolvable:$true] %s41
      %s43 = sshll.u32 [#allocation7], 4
      %s44 = int_to_ptr.vmem [resolvable:$true] %s43
      %49 = dma.hbm_to_vmem [thread:$0]  %s42, 16384, %s44, [#allocation6], 256, 256, 16
    $region13: #{tpu_custom_call.1} parent=1 // pred_fallthru
      _
    // Predicated region
    $region14: #{tpu_custom_call.1} parent=1 // pred_check
      _
    $region15: #{tpu_custom_call.1} parent=1 // pred_check_branch
      %51 = sbr.rel (0) target = $region17
    $region16: #{tpu_custom_call.1} parent=1 // pred_region
      %53 = vsyncadd [#allocation9], 0
      %s54 = sshll.u32 %s3, 4
      %s55 = int_to_ptr.hbm [resolvable:$true] %s54
      %s56 = sshll.u32 [#allocation8], 4
      %s57 = int_to_ptr.vmem [resolvable:$true] %s56
      %62 = dma.hbm_to_vmem [thread:$0]  %s55, 512, %s57, [#allocation9], 256, 256, 16
    $region17: #{tpu_custom_call.1} parent=1 // pred_fallthru
      _
    // Predicated region
    $region18: #{tpu_custom_call.1} parent=1 // pred_check
      _
    $region19: #{tpu_custom_call.1} parent=1 // pred_check_branch
      %64 = sbr.rel (0) target = $region21
    $region20: #{tpu_custom_call.1} parent=1 // pred_region
      %66 = dma.done [#allocation3], 128
    $region21: #{tpu_custom_call.1} parent=1 // pred_fallthru
      _
    // Predicated region
    $region22: #{tpu_custom_call.1} parent=1 // pred_check
      _
    $region23: #{tpu_custom_call.1} parent=1 // pred_check_branch
      %68 = sbr.rel (0) target = $region25
    $region24: #{tpu_custom_call.1} parent=1 // pred_region
      %70 = dma.done [#allocation6], 10240
    $region25: #{tpu_custom_call.1} parent=1 // pred_fallthru
      _
    // Predicated region
    $region26: #{tpu_custom_call.1} parent=1 // pred_check
      _
    $region27: #{tpu_custom_call.1} parent=1 // pred_check_branch
      %72 = sbr.rel (0) target = $region29
    $region28: #{tpu_custom_call.1} parent=1 // pred_region
      %74 = dma.done [#allocation6], 16384
    $region29: #{tpu_custom_call.1} parent=1 // pred_fallthru
      _
    // Predicated region
    $region30: #{tpu_custom_call.1} parent=1 // pred_check
      _
    $region31: #{tpu_custom_call.1} parent=1 // pred_check_branch
      %76 = sbr.rel (0) target = $region33
    $region32: #{tpu_custom_call.1} parent=1 // pred_region
      %78 = dma.done [#allocation9], 512
    $region33: #{tpu_custom_call.1} parent=1 // pred_fallthru
      _
    %v79 = vld [vmem:[#allocation2] sm:$0xff]
    %v80 = vld [vmem:[#allocation5] sm:$0xf]
    %v81 = vld [vmem:[#allocation5 + $0x8] sm:$0xf]
    %v82 = vld [vmem:[#allocation5 + $0x10] sm:$0xf]
    %v83 = vld [vmem:[#allocation5 + $0x18] sm:$0xf]
    %v84 = vld [vmem:[#allocation5 + $0x20] sm:$0xf]
    %v85 = vld [vmem:[#allocation5 + $0x28] sm:$0xf]
    %v86 = vld [vmem:[#allocation5 + $0x30] sm:$0xf]
    %v87 = vld [vmem:[#allocation5 + $0x38] sm:$0xf]
    %v88 = vld [vmem:[#allocation5 + $0x40] sm:$0xf]
    %v89 = vld [vmem:[#allocation5 + $0x48] sm:$0xf]
    %v90 = vld [vmem:[#allocation5 + $0x50] sm:$0xf]
    %v91 = vld [vmem:[#allocation5 + $0x58] sm:$0xf]
    %v92 = vld [vmem:[#allocation5 + $0x60] sm:$0xf]
    %v93 = vld [vmem:[#allocation5 + $0x68] sm:$0xf]
    %v94 = vld [vmem:[#allocation5 + $0x70] sm:$0xf]
    %v95 = vld [vmem:[#allocation5 + $0x78] sm:$0xf]
    %v96 = vld [vmem:[#allocation8] ss:$0 sm:$0xff]
    %v97 = vld [vmem:[#allocation8 + $0x1] ss:$0 sm:$0xff]
    %v98 = vld [vmem:[#allocation8 + $0x2] ss:$0 sm:$0xff]
    %v99 = vld [vmem:[#allocation7] sm:$0xff]
    %v100 = vld [vmem:[#allocation7 + $0x10] sm:$0xff]
    %v101 = vld [vmem:[#allocation7 + $0x20] sm:$0xff]
    %v102 = vld [vmem:[#allocation7 + $0x30] sm:$0xff]
    %v103 = vld [vmem:[#allocation7 + $0x40] sm:$0xff]
    %v104 = vld [vmem:[#allocation7 + $0x50] sm:$0xff]
    %v105 = vld [vmem:[#allocation7 + $0x60] sm:$0xff]
    %v106 = vld [vmem:[#allocation7 + $0x70] sm:$0xff]
    %v107 = vld [vmem:[#allocation7 + $0x80] sm:$0xff]
    %v108 = vld [vmem:[#allocation7 + $0x90] sm:$0xff]
    %v109 = vld [vmem:[#allocation7 + $0xa0] sm:$0xff]
    %v110 = vld [vmem:[#allocation7 + $0xb0] sm:$0xff]
    %v111 = vld [vmem:[#allocation7 + $0xc0] sm:$0xff]
    %v112 = vld [vmem:[#allocation7 + $0xd0] sm:$0xff]
    %v113 = vld [vmem:[#allocation7 + $0xe0] sm:$0xff]
    %v114 = vld [vmem:[#allocation7 + $0xf0] sm:$0xff]
    %v115 = vpack.c.bf16 %v79, %v79
    %v132 = vunpack.c.l.b16 %v80
    %v133 = vunpack.c.l.b16 %v81
    %v134 = vunpack.c.l.b16 %v82
    %v135 = vunpack.c.l.b16 %v83
    %v136 = vunpack.c.l.b16 %v84
    %v137 = vunpack.c.l.b16 %v85
    %v138 = vunpack.c.l.b16 %v86
    %v139 = vunpack.c.l.b16 %v87
    %v140 = vunpack.c.l.b16 %v88
    %v141 = vunpack.c.l.b16 %v89
    %v142 = vunpack.c.l.b16 %v90
    %v143 = vunpack.c.l.b16 %v91
    %v144 = vunpack.c.l.b16 %v92
    %v145 = vunpack.c.l.b16 %v93
    %v146 = vunpack.c.l.b16 %v94
    %v147 = vunpack.c.l.b16 %v95
    %v148 = vpack.c.b16 %v133, %v132
    %v149 = vpack.c.b16 %v135, %v134
    %v150 = vpack.c.b16 %v137, %v136
    %v151 = vpack.c.b16 %v139, %v138
    %v152 = vpack.c.b16 %v141, %v140
    %v153 = vpack.c.b16 %v143, %v142
    %v154 = vpack.c.b16 %v145, %v144
    %v155 = vpack.c.b16 %v147, %v146
    %164 = vmatpush.bf16.msra.mxu0 %v155
    %165 = vmatpush.bf16.msra.mxu0 %v154
    %166 = vmatpush.bf16.msra.mxu0 %v153
    %167 = vmatpush.bf16.msra.mxu0 %v152
    %168 = vmatpush.bf16.msra.mxu0 %v151
    %169 = vmatpush.bf16.msra.mxu0 %v150
    %170 = vmatpush.bf16.msra.mxu0 %v149
    %171 = vmatpush.bf16.msra.mxu0 %v148
    %172 = vmatmul.bf16.gmra.mxu0 %v115
    %v173 = vpop.f32.mrf.mxu0
    %v174 = vadd.f32 %v96, %v173
    %v175 = vpop.f32.mrf.mxu0
    %176 = vdwg.mxu0
    %v177 = vmax.f32 %v174, 0.0
    %v178 = vrot.slane %v177, 4
    %v179 = vadd.f32 %v177, %v178
    %v180 = vrot.slane %v179, 2
    %v181 = vadd.f32 %v179, %v180
    %v182 = vrot.slane %v181, 1
    %v183 = vadd.f32 %v181, %v182
    %v184 = vmul.f32 %v177, %v177
    %v185 = vrot.slane %v184, 4
    %v186 = vadd.f32 %v184, %v185
    %v187 = vrot.slane %v186, 2
    %v188 = vadd.f32 %v186, %v187
    %v189 = vrot.slane %v188, 1
    %v190 = vadd.f32 %v188, %v189
    %vm191 = vcmask 1040384
    %v192 = vsel %vm191, %v183, %v190
    %v193 = vmul.f32 %v192, 0.008333334
    %194 = vmatpush.msra.mxu0 %v114
    %195 = vmatpush.msra.mxu0 %v113
    %196 = vmatpush.msra.mxu0 %v112
    %197 = vmatpush.msra.mxu0 %v111
    %198 = vmatpush.msra.mxu0 %v110
    %199 = vmatpush.msra.mxu0 %v109
    %200 = vmatpush.msra.mxu0 %v108
    %201 = vmatpush.msra.mxu0 %v107
    %202 = vmatpush.msra.mxu0 %v106
    %203 = vmatpush.msra.mxu0 %v105
    %204 = vmatpush.msra.mxu0 %v104
    %205 = vmatpush.msra.mxu0 %v103
    %206 = vmatpush.msra.mxu0 %v102
    %207 = vmatpush.msra.mxu0 %v101
    %208 = vmatpush.msra.mxu0 %v100
    %209 = vmatpush.msra.mxu0 %v99
    %210 = vmatmul.f32.gmra.mxu0 %v193
    %v211 = vpop.f32.mrf.mxu0
    %v212 = vadd.f32 0.0, %v211
    %213 = vdwg.mxu0
    %v214 = vmul.f32 %v212, %v212
    %v216 = vrot.slane %v214, 7
    %v218 = vsub.f32 %v212, %v216
    %v219 = vadd.f32 %v218, 1e-05
    %v220 = vrsqrt.pop %v219
    %v221 = vmul.f32 %v220, %v219
    %v222 = vmul.f32 %v221, %v220
    %v223 = vmul.f32 0.5, %v222
    %v224 = vsub.f32 1.5, %v223
    %v225 = vmul.f32 %v220, %v224
    %vm226 = vweird.f32 %v219
    %vm227 = vweird.f32 %v220
    %vm228 = vmor %vm226, %vm227
    %v229 = vsel %vm228, %v220, %v225
    %v230 = vmul.f32 %v97, %v229
    %v232 = vrot.slane %v230, 1
    %v234 = vmul.f32 %v212, %v232
    %v235 = vsub.f32 %v98, %v234
    %v236 = vperm.slane %v230, 1
    %v237 = vmul.f32 %v177, %v236
    %v238 = vperm.slane %v235, 0
    %v239 = vadd.f32 %v237, %v238
    %v240 = vld [vmem:[#allocation5 + $0x80] sm:$0xff]
    %v241 = vld [vmem:[#allocation5 + $0x88] sm:$0xff]
    %v242 = vld [vmem:[#allocation5 + $0x90] sm:$0xff]
    %v243 = vld [vmem:[#allocation5 + $0x98] sm:$0xff]
    %v244 = vld [vmem:[#allocation5 + $0xa0] sm:$0xff]
    %v245 = vld [vmem:[#allocation5 + $0xa8] sm:$0xff]
    %v246 = vld [vmem:[#allocation5 + $0xb0] sm:$0xff]
    %v247 = vld [vmem:[#allocation5 + $0xb8] sm:$0xff]
    %v248 = vld [vmem:[#allocation5 + $0xc0] sm:$0xff]
    %v249 = vld [vmem:[#allocation5 + $0xc8] sm:$0xff]
    %v250 = vld [vmem:[#allocation5 + $0xd0] sm:$0xff]
    %v251 = vld [vmem:[#allocation5 + $0xd8] sm:$0xff]
    %v252 = vld [vmem:[#allocation5 + $0xe0] sm:$0xff]
    %v253 = vld [vmem:[#allocation5 + $0xe8] sm:$0xff]
    %v254 = vld [vmem:[#allocation5 + $0xf0] sm:$0xff]
    %v255 = vld [vmem:[#allocation5 + $0xf8] sm:$0xff]
    %s256 = scalar_lea.vmem [#allocation8], 3
    %v257 = vld [vmem:[%s256] ss:$8 sm:$0x3]
    %s258 = scalar_lea.vmem [#allocation8], 4
    %v259 = vld [vmem:[%s258] ss:$8 sm:$0x3]
    %s260 = scalar_lea.vmem [#allocation8], 5
    %v261 = vld [vmem:[%s260] ss:$8 sm:$0x3]
    %v262 = vld [vmem:[#allocation7 + $0x100] sm:$0xff]
    %v263 = vld [vmem:[#allocation7 + $0x108] sm:$0xff]
    %v264 = vld [vmem:[#allocation7 + $0x110] sm:$0xff]
    %v265 = vld [vmem:[#allocation7 + $0x118] sm:$0xff]
    %v266 = vld [vmem:[#allocation7 + $0x120] sm:$0xff]
    %v267 = vld [vmem:[#allocation7 + $0x128] sm:$0xff]
    %v268 = vld [vmem:[#allocation7 + $0x130] sm:$0xff]
    %v269 = vld [vmem:[#allocation7 + $0x138] sm:$0xff]
    %v270 = vld [vmem:[#allocation7 + $0x140] sm:$0xff]
    %v271 = vld [vmem:[#allocation7 + $0x148] sm:$0xff]
    %v272 = vld [vmem:[#allocation7 + $0x150] sm:$0xff]
    %v273 = vld [vmem:[#allocation7 + $0x158] sm:$0xff]
    %v274 = vld [vmem:[#allocation7 + $0x160] sm:$0xff]
    %v275 = vld [vmem:[#allocation7 + $0x168] sm:$0xff]
    %v276 = vld [vmem:[#allocation7 + $0x170] sm:$0xff]
    %v277 = vld [vmem:[#allocation7 + $0x178] sm:$0xff]
    %v278 = vld [vmem:[#allocation7 + $0x180] sm:$0xff]
    %v279 = vld [vmem:[#allocation7 + $0x188] sm:$0xff]
    %v280 = vld [vmem:[#allocation7 + $0x190] sm:$0xff]
    %v281 = vld [vmem:[#allocation7 + $0x198] sm:$0xff]
    %v282 = vld [vmem:[#allocation7 + $0x1a0] sm:$0xff]
    %v283 = vld [vmem:[#allocation7 + $0x1a8] sm:$0xff]
    %v284 = vld [vmem:[#allocation7 + $0x1b0] sm:$0xff]
    %v285 = vld [vmem:[#allocation7 + $0x1b8] sm:$0xff]
    %v286 = vld [vmem:[#allocation7 + $0x1c0] sm:$0xff]
    %v287 = vld [vmem:[#allocation7 + $0x1c8] sm:$0xff]
    %v288 = vld [vmem:[#allocation7 + $0x1d0] sm:$0xff]
    %v289 = vld [vmem:[#allocation7 + $0x1d8] sm:$0xff]
    %v290 = vld [vmem:[#allocation7 + $0x1e0] sm:$0xff]
    %v291 = vld [vmem:[#allocation7 + $0x1e8] sm:$0xff]
    %v292 = vld [vmem:[#allocation7 + $0x1f0] sm:$0xff]
    %v293 = vld [vmem:[#allocation7 + $0x1f8] sm:$0xff]
    %v294 = vld [vmem:[#allocation7 + $0x200] sm:$0xff]
    %v295 = vld [vmem:[#allocation7 + $0x208] sm:$0xff]
    %v296 = vld [vmem:[#allocation7 + $0x210] sm:$0xff]
    %v297 = vld [vmem:[#allocation7 + $0x218] sm:$0xff]
    %v298 = vld [vmem:[#allocation7 + $0x220] sm:$0xff]
    %v299 = vld [vmem:[#allocation7 + $0x228] sm:$0xff]
    %v300 = vld [vmem:[#allocation7 + $0x230] sm:$0xff]
    %v301 = vld [vmem:[#allocation7 + $0x238] sm:$0xff]
    %v302 = vld [vmem:[#allocation7 + $0x240] sm:$0xff]
    %v303 = vld [vmem:[#allocation7 + $0x248] sm:$0xff]
    %v304 = vld [vmem:[#allocation7 + $0x250] sm:$0xff]
    %v305 = vld [vmem:[#allocation7 + $0x258] sm:$0xff]
    %v306 = vld [vmem:[#allocation7 + $0x260] sm:$0xff]
    %v307 = vld [vmem:[#allocation7 + $0x268] sm:$0xff]
    %v308 = vld [vmem:[#allocation7 + $0x270] sm:$0xff]
    %v309 = vld [vmem:[#allocation7 + $0x278] sm:$0xff]
    %v310 = vld [vmem:[#allocation7 + $0x280] sm:$0xff]
    %v311 = vld [vmem:[#allocation7 + $0x288] sm:$0xff]
    %v312 = vld [vmem:[#allocation7 + $0x290] sm:$0xff]
    %v313 = vld [vmem:[#allocation7 + $0x298] sm:$0xff]
    %v314 = vld [vmem:[#allocation7 + $0x2a0] sm:$0xff]
    %v315 = vld [vmem:[#allocation7 + $0x2a8] sm:$0xff]
    %v316 = vld [vmem:[#allocation7 + $0x2b0] sm:$0xff]
    %v317 = vld [vmem:[#allocation7 + $0x2b8] sm:$0xff]
    %v318 = vld [vmem:[#allocation7 + $0x2c0] sm:$0xff]
    %v319 = vld [vmem:[#allocation7 + $0x2c8] sm:$0xff]
    %v320 = vld [vmem:[#allocation7 + $0x2d0] sm:$0xff]
    %v321 = vld [vmem:[#allocation7 + $0x2d8] sm:$0xff]
    %v322 = vld [vmem:[#allocation7 + $0x2e0] sm:$0xff]
    %v323 = vld [vmem:[#allocation7 + $0x2e8] sm:$0xff]
    %v324 = vld [vmem:[#allocation7 + $0x2f0] sm:$0xff]
    %v325 = vld [vmem:[#allocation7 + $0x2f8] sm:$0xff]
    %v326 = vpack.c.bf16 %v239, %v239
    %v328 = vperm.slane %v257, 0
    %v329 = vperm.slane %v257, 1
    %v348 = vunpack.c.l.b16 %v240
    %v349 = vunpack.c.h.b16 %v240
    %v350 = vunpack.c.l.b16 %v241
    %v351 = vunpack.c.h.b16 %v241
    %v352 = vunpack.c.l.b16 %v242
    %v353 = vunpack.c.h.b16 %v242
    %v354 = vunpack.c.l.b16 %v243
    %v355 = vunpack.c.h.b16 %v243
    %v356 = vunpack.c.l.b16 %v244
    %v357 = vunpack.c.h.b16 %v244
    %v358 = vunpack.c.l.b16 %v245
    %v359 = vunpack.c.h.b16 %v245
    %v360 = vunpack.c.l.b16 %v246
    %v361 = vunpack.c.h.b16 %v246
    %v362 = vunpack.c.l.b16 %v247
    %v363 = vunpack.c.h.b16 %v247
    %v364 = vunpack.c.l.b16 %v248
    %v365 = vunpack.c.h.b16 %v248
    %v366 = vunpack.c.l.b16 %v249
    %v367 = vunpack.c.h.b16 %v249
    %v368 = vunpack.c.l.b16 %v250
    %v369 = vunpack.c.h.b16 %v250
    %v370 = vunpack.c.l.b16 %v251
    %v371 = vunpack.c.h.b16 %v251
    %v372 = vunpack.c.l.b16 %v252
    %v373 = vunpack.c.h.b16 %v252
    %v374 = vunpack.c.l.b16 %v253
    %v375 = vunpack.c.h.b16 %v253
    %v376 = vunpack.c.l.b16 %v254
    %v377 = vunpack.c.h.b16 %v254
    %v378 = vunpack.c.l.b16 %v255
    %v379 = vunpack.c.h.b16 %v255
    %v380 = vpack.c.b16 %v350, %v348
    %v381 = vpack.c.b16 %v351, %v349
    %v382 = vpack.c.b16 %v354, %v352
    %v383 = vpack.c.b16 %v355, %v353
    %v384 = vpack.c.b16 %v358, %v356
    %v385 = vpack.c.b16 %v359, %v357
    %v386 = vpack.c.b16 %v362, %v360
    %v387 = vpack.c.b16 %v363, %v361
    %v388 = vpack.c.b16 %v366, %v364
    %v389 = vpack.c.b16 %v367, %v365
    %v390 = vpack.c.b16 %v370, %v368
    %v391 = vpack.c.b16 %v371, %v369
    %v392 = vpack.c.b16 %v374, %v372
    %v393 = vpack.c.b16 %v375, %v373
    %v394 = vpack.c.b16 %v378, %v376
    %v395 = vpack.c.b16 %v379, %v377
    %412 = vmatpush.bf16.msra.mxu0 %v394
    %413 = vmatpush.bf16.msra.mxu0 %v392
    %414 = vmatpush.bf16.msra.mxu0 %v390
    %415 = vmatpush.bf16.msra.mxu0 %v388
    %416 = vmatpush.bf16.msra.mxu0 %v386
    %417 = vmatpush.bf16.msra.mxu0 %v384
    %418 = vmatpush.bf16.msra.mxu0 %v382
    %419 = vmatpush.bf16.msra.mxu0 %v380
    %420 = vmatmul.bf16.gmra.mxu0 %v326
    %v421 = vpop.f32.mrf.mxu0
    %v422 = vadd.f32 %v328, %v421
    %v423 = vpop.f32.mrf.mxu0
    %424 = vdwg.mxu0
    %425 = vmatpush.bf16.msra.mxu0 %v395
    %426 = vmatpush.bf16.msra.mxu0 %v393
    %427 = vmatpush.bf16.msra.mxu0 %v391
    %428 = vmatpush.bf16.msra.mxu0 %v389
    %429 = vmatpush.bf16.msra.mxu0 %v387
    %430 = vmatpush.bf16.msra.mxu0 %v385
    %431 = vmatpush.bf16.msra.mxu0 %v383
    %432 = vmatpush.bf16.msra.mxu0 %v381
    %433 = vmatmul.bf16.gmra.mxu0 %v326
    %v434 = vpop.f32.mrf.mxu0
    %v435 = vadd.f32 %v329, %v434
    %v436 = vpop.f32.mrf.mxu0
    %437 = vdwg.mxu0
    %v438 = vmax.f32 %v422, 0.0
    %v439 = vmax.f32 %v435, 0.0
    %v440 = vrot.slane %v438, 4
    %v441 = vadd.f32 %v438, %v440
    %v442 = vrot.slane %v441, 2
    %v443 = vadd.f32 %v441, %v442
    %v444 = vrot.slane %v443, 1
    %v445 = vadd.f32 %v443, %v444
    %v446 = vrot.slane %v439, 4
    %v447 = vadd.f32 %v439, %v446
    %v448 = vrot.slane %v447, 2
    %v449 = vadd.f32 %v447, %v448
    %v450 = vrot.slane %v449, 1
    %v451 = vadd.f32 %v449, %v450
    %v452 = vmul.f32 %v438, %v438
    %v453 = vmul.f32 %v439, %v439
    %v454 = vrot.slane %v452, 4
    %v455 = vadd.f32 %v452, %v454
    %v456 = vrot.slane %v455, 2
    %v457 = vadd.f32 %v455, %v456
    %v458 = vrot.slane %v457, 1
    %v459 = vadd.f32 %v457, %v458
    %v460 = vrot.slane %v453, 4
    %v461 = vadd.f32 %v453, %v460
    %v462 = vrot.slane %v461, 2
    %v463 = vadd.f32 %v461, %v462
    %v464 = vrot.slane %v463, 1
    %v465 = vadd.f32 %v463, %v464
    %v466 = vsel %vm191, %v445, %v459
    %v467 = vsel %vm191, %v451, %v465
    %v468 = vmul.f32 %v466, 0.008333334
    %v469 = vmul.f32 %v467, 0.008333334
    %470 = vmatpush.msra.mxu0 %v292
    %471 = vmatpush.msra.mxu0 %v290
    %472 = vmatpush.msra.mxu0 %v288
    %473 = vmatpush.msra.mxu0 %v286
    %474 = vmatpush.msra.mxu0 %v284
    %475 = vmatpush.msra.mxu0 %v282
    %476 = vmatpush.msra.mxu0 %v280
    %477 = vmatpush.msra.mxu0 %v278
    %478 = vmatpush.msra.mxu0 %v276
    %479 = vmatpush.msra.mxu0 %v274
    %480 = vmatpush.msra.mxu0 %v272
    %481 = vmatpush.msra.mxu0 %v270
    %482 = vmatpush.msra.mxu0 %v268
    %483 = vmatpush.msra.mxu0 %v266
    %484 = vmatpush.msra.mxu0 %v264
    %485 = vmatpush.msra.mxu0 %v262
    %486 = vmatmul.f32.gmra.mxu0 %v468
    %v487 = vpop.f32.mrf.mxu0
    %v488 = vadd.f32 0.0, %v487
    %489 = vdwg.mxu0
    %490 = vmatpush.msra.mxu0 %v324
    %491 = vmatpush.msra.mxu0 %v322
    %492 = vmatpush.msra.mxu0 %v320
    %493 = vmatpush.msra.mxu0 %v318
    %494 = vmatpush.msra.mxu0 %v316
    %495 = vmatpush.msra.mxu0 %v314
    %496 = vmatpush.msra.mxu0 %v312
    %497 = vmatpush.msra.mxu0 %v310
    %498 = vmatpush.msra.mxu0 %v308
    %499 = vmatpush.msra.mxu0 %v306
    %500 = vmatpush.msra.mxu0 %v304
    %501 = vmatpush.msra.mxu0 %v302
    %502 = vmatpush.msra.mxu0 %v300
    %503 = vmatpush.msra.mxu0 %v298
    %504 = vmatpush.msra.mxu0 %v296
    %505 = vmatpush.msra.mxu0 %v294
    %506 = vmatmul.f32.gmra.mxu0 %v469
    %v507 = vpop.f32.mrf.mxu0
    %v508 = vadd.f32 %v488, %v507
    %509 = vdwg.mxu0
    %510 = vmatpush.msra.mxu0 %v293
    %511 = vmatpush.msra.mxu0 %v291
    %512 = vmatpush.msra.mxu0 %v289
    %513 = vmatpush.msra.mxu0 %v287
    %514 = vmatpush.msra.mxu0 %v285
    %515 = vmatpush.msra.mxu0 %v283
    %516 = vmatpush.msra.mxu0 %v281
    %517 = vmatpush.msra.mxu0 %v279
    %518 = vmatpush.msra.mxu0 %v277
    %519 = vmatpush.msra.mxu0 %v275
    %520 = vmatpush.msra.mxu0 %v273
    %521 = vmatpush.msra.mxu0 %v271
    %522 = vmatpush.msra.mxu0 %v269
    %523 = vmatpush.msra.mxu0 %v267
    %524 = vmatpush.msra.mxu0 %v265
    %525 = vmatpush.msra.mxu0 %v263
    %526 = vmatmul.f32.gmra.mxu0 %v468
    %v527 = vpop.f32.mrf.mxu0
    %v528 = vadd.f32 0.0, %v527
    %529 = vdwg.mxu0
    %530 = vmatpush.msra.mxu0 %v325
    %531 = vmatpush.msra.mxu0 %v323
    %532 = vmatpush.msra.mxu0 %v321
    %533 = vmatpush.msra.mxu0 %v319
    %534 = vmatpush.msra.mxu0 %v317
    %535 = vmatpush.msra.mxu0 %v315
    %536 = vmatpush.msra.mxu0 %v313
    %537 = vmatpush.msra.mxu0 %v311
    %538 = vmatpush.msra.mxu0 %v309
    %539 = vmatpush.msra.mxu0 %v307
    %540 = vmatpush.msra.mxu0 %v305
    %541 = vmatpush.msra.mxu0 %v303
    %542 = vmatpush.msra.mxu0 %v301
    %543 = vmatpush.msra.mxu0 %v299
    %544 = vmatpush.msra.mxu0 %v297
    %545 = vmatpush.msra.mxu0 %v295
    %546 = vmatmul.f32.gmra.mxu0 %v469
    %v547 = vpop.f32.mrf.mxu0
    %v548 = vadd.f32 %v528, %v547
    %549 = vdwg.mxu0
    %v550 = vmul.f32 %v508, %v508
    %v551 = vmul.f32 %v548, %v548
    %v554 = vrot.slane %v550, 7
    %v555 = vrot.slane %v551, 7
    %v558 = vsub.f32 %v508, %v554
    %v559 = vsub.f32 %v548, %v555
    %v560 = vadd.f32 %v558, 1e-05
    %v561 = vadd.f32 %v559, 1e-05
    %v562 = vrsqrt.pop %v560
    %v563 = vmul.f32 %v562, %v560
    %v564 = vmul.f32 %v563, %v562
    %v565 = vmul.f32 0.5, %v564
    %v566 = vsub.f32 1.5, %v565
    %v567 = vmul.f32 %v562, %v566
    %vm568 = vweird.f32 %v560
    %vm569 = vweird.f32 %v562
    %vm570 = vmor %vm568, %vm569
    %v571 = vsel %vm570, %v562, %v567
    %v572 = vrsqrt.pop %v561
    %v573 = vmul.f32 %v572, %v561
    %v574 = vmul.f32 %v573, %v572
    %v575 = vmul.f32 0.5, %v574
    %v576 = vsub.f32 1.5, %v575
    %v577 = vmul.f32 %v572, %v576
    %vm578 = vweird.f32 %v561
    %vm579 = vweird.f32 %v572
    %vm580 = vmor %vm578, %vm579
    %v581 = vsel %vm580, %v572, %v577
    %584 = vst [vmem:[#allocation1] sm:$0xff] %v571
    %585 = vst [vmem:[#allocation1 + $0x9] sm:$0xff] %v581
    %s586 = scalar_lea.vmem [#allocation1], 1
    %v587 = vld [vmem:[%s586] ss:$9 sm:$0xff]
    %v589 = vmul.f32 %v259, %v587
    %v591 = vperm.slane %v589, 0
    %v592 = vperm.slane %v589, 1
    %v595 = vmul.f32 %v508, %v591
    %v596 = vmul.f32 %v548, %v592
    %v599 = vrot.slane %v596, 7
    %v600 = vsel %vm191, %v595, %v599
    %v602 = vsub.f32 %v261, %v600
    %v603 = vmul.f32 %v438, %v591
    %v604 = vmul.f32 %v439, %v592
    %v606 = vperm.slane %v602, 0
    %v607 = vperm.slane %v602, 1
    %v610 = vadd.f32 %v603, %v606
    %v611 = vadd.f32 %v604, %v607
    %v612 = vld [vmem:[#allocation5 + $0x100] sm:$0xf]
    %v613 = vld [vmem:[#allocation5 + $0x108] sm:$0xf]
    %v614 = vld [vmem:[#allocation5 + $0x110] sm:$0xf]
    %v615 = vld [vmem:[#allocation5 + $0x118] sm:$0xf]
    %v616 = vld [vmem:[#allocation5 + $0x120] sm:$0xf]
    %v617 = vld [vmem:[#allocation5 + $0x128] sm:$0xf]
    %v618 = vld [vmem:[#allocation5 + $0x130] sm:$0xf]
    %v619 = vld [vmem:[#allocation5 + $0x138] sm:$0xf]
    %v620 = vld [vmem:[#allocation5 + $0x140] sm:$0xf]
    %v621 = vld [vmem:[#allocation5 + $0x148] sm:$0xf]
    %v622 = vld [vmem:[#allocation5 + $0x150] sm:$0xf]
    %v623 = vld [vmem:[#allocation5 + $0x158] sm:$0xf]
    %v624 = vld [vmem:[#allocation5 + $0x160] sm:$0xf]
    %v625 = vld [vmem:[#allocation5 + $0x168] sm:$0xf]
    %v626 = vld [vmem:[#allocation5 + $0x170] sm:$0xf]
    %v627 = vld [vmem:[#allocation5 + $0x178] sm:$0xf]
    %v628 = vld [vmem:[#allocation5 + $0x180] sm:$0xf]
    %v629 = vld [vmem:[#allocation5 + $0x188] sm:$0xf]
    %v630 = vld [vmem:[#allocation5 + $0x190] sm:$0xf]
    %v631 = vld [vmem:[#allocation5 + $0x198] sm:$0xf]
    %v632 = vld [vmem:[#allocation5 + $0x1a0] sm:$0xf]
    %v633 = vld [vmem:[#allocation5 + $0x1a8] sm:$0xf]
    %v634 = vld [vmem:[#allocation5 + $0x1b0] sm:$0xf]
    %v635 = vld [vmem:[#allocation5 + $0x1b8] sm:$0xf]
    %v636 = vld [vmem:[#allocation5 + $0x1c0] sm:$0xf]
    %v637 = vld [vmem:[#allocation5 + $0x1c8] sm:$0xf]
    %v638 = vld [vmem:[#allocation5 + $0x1d0] sm:$0xf]
    %v639 = vld [vmem:[#allocation5 + $0x1d8] sm:$0xf]
    %v640 = vld [vmem:[#allocation5 + $0x1e0] sm:$0xf]
    %v641 = vld [vmem:[#allocation5 + $0x1e8] sm:$0xf]
    %v642 = vld [vmem:[#allocation5 + $0x1f0] sm:$0xf]
    %v643 = vld [vmem:[#allocation5 + $0x1f8] sm:$0xf]
    %v644 = vld [vmem:[#allocation8 + $0x6] ss:$0 sm:$0xff]
    %v645 = vld [vmem:[#allocation8 + $0x7] ss:$0 sm:$0xff]
    %v646 = vld [vmem:[#allocation8 + $0x10] ss:$0 sm:$0xff]
    %v647 = vld [vmem:[#allocation7 + $0x300] sm:$0xff]
    %v648 = vld [vmem:[#allocation7 + $0x310] sm:$0xff]
    %v649 = vld [vmem:[#allocation7 + $0x320] sm:$0xff]
    %v650 = vld [vmem:[#allocation7 + $0x330] sm:$0xff]
    %v651 = vld [vmem:[#allocation7 + $0x340] sm:$0xff]
    %v652 = vld [vmem:[#allocation7 + $0x350] sm:$0xff]
    %v653 = vld [vmem:[#allocation7 + $0x360] sm:$0xff]
    %v654 = vld [vmem:[#allocation7 + $0x370] sm:$0xff]
    %v655 = vld [vmem:[#allocation7 + $0x380] sm:$0xff]
    %v656 = vld [vmem:[#allocation7 + $0x390] sm:$0xff]
    %v657 = vld [vmem:[#allocation7 + $0x3a0] sm:$0xff]
    %v658 = vld [vmem:[#allocation7 + $0x3b0] sm:$0xff]
    %v659 = vld [vmem:[#allocation7 + $0x3c0] sm:$0xff]
    %v660 = vld [vmem:[#allocation7 + $0x3d0] sm:$0xff]
    %v661 = vld [vmem:[#allocation7 + $0x3e0] sm:$0xff]
    %v662 = vld [vmem:[#allocation7 + $0x3f0] sm:$0xff]
    %v663 = vpack.c.bf16 %v610, %v610
    %v664 = vpack.c.bf16 %v611, %v611
    %v697 = vunpack.c.l.b16 %v612
    %v698 = vunpack.c.l.b16 %v613
    %v699 = vunpack.c.l.b16 %v614
    %v700 = vunpack.c.l.b16 %v615
    %v701 = vunpack.c.l.b16 %v616
    %v702 = vunpack.c.l.b16 %v617
    %v703 = vunpack.c.l.b16 %v618
    %v704 = vunpack.c.l.b16 %v619
    %v705 = vunpack.c.l.b16 %v620
    %v706 = vunpack.c.l.b16 %v621
    %v707 = vunpack.c.l.b16 %v622
    %v708 = vunpack.c.l.b16 %v623
    %v709 = vunpack.c.l.b16 %v624
    %v710 = vunpack.c.l.b16 %v625
    %v711 = vunpack.c.l.b16 %v626
    %v712 = vunpack.c.l.b16 %v627
    %v713 = vunpack.c.l.b16 %v628
    %v714 = vunpack.c.l.b16 %v629
    %v715 = vunpack.c.l.b16 %v630
    %v716 = vunpack.c.l.b16 %v631
    %v717 = vunpack.c.l.b16 %v632
    %v718 = vunpack.c.l.b16 %v633
    %v719 = vunpack.c.l.b16 %v634
    %v720 = vunpack.c.l.b16 %v635
    %v721 = vunpack.c.l.b16 %v636
    %v722 = vunpack.c.l.b16 %v637
    %v723 = vunpack.c.l.b16 %v638
    %v724 = vunpack.c.l.b16 %v639
    %v725 = vunpack.c.l.b16 %v640
    %v726 = vunpack.c.l.b16 %v641
    %v727 = vunpack.c.l.b16 %v642
    %v728 = vunpack.c.l.b16 %v643
    %v729 = vpack.c.b16 %v698, %v697
    %v730 = vpack.c.b16 %v700, %v699
    %v731 = vpack.c.b16 %v702, %v701
    %v732 = vpack.c.b16 %v704, %v703
    %v733 = vpack.c.b16 %v706, %v705
    %v734 = vpack.c.b16 %v708, %v707
    %v735 = vpack.c.b16 %v710, %v709
    %v736 = vpack.c.b16 %v712, %v711
    %v737 = vpack.c.b16 %v714, %v713
    %v738 = vpack.c.b16 %v716, %v715
    %v739 = vpack.c.b16 %v718, %v717
    %v740 = vpack.c.b16 %v720, %v719
    %v741 = vpack.c.b16 %v722, %v721
    %v742 = vpack.c.b16 %v724, %v723
    %v743 = vpack.c.b16 %v726, %v725
    %v744 = vpack.c.b16 %v728, %v727
    %761 = vmatpush.bf16.msra.mxu0 %v736
    %762 = vmatpush.bf16.msra.mxu0 %v735
    %763 = vmatpush.bf16.msra.mxu0 %v734
    %764 = vmatpush.bf16.msra.mxu0 %v733
    %765 = vmatpush.bf16.msra.mxu0 %v732
    %766 = vmatpush.bf16.msra.mxu0 %v731
    %767 = vmatpush.bf16.msra.mxu0 %v730
    %768 = vmatpush.bf16.msra.mxu0 %v729
    %769 = vmatmul.bf16.gmra.mxu0 %v663
    %v770 = vpop.f32.mrf.mxu0
    %v771 = vadd.f32 %v644, %v770
    %v772 = vpop.f32.mrf.mxu0
    %773 = vdwg.mxu0
    %774 = vmatpush.bf16.msra.mxu0 %v744
    %775 = vmatpush.bf16.msra.mxu0 %v743
    %776 = vmatpush.bf16.msra.mxu0 %v742
    %777 = vmatpush.bf16.msra.mxu0 %v741
    %778 = vmatpush.bf16.msra.mxu0 %v740
    %779 = vmatpush.bf16.msra.mxu0 %v739
    %780 = vmatpush.bf16.msra.mxu0 %v738
    %781 = vmatpush.bf16.msra.mxu0 %v737
    %782 = vmatmul.bf16.gmra.mxu0 %v664
    %v783 = vpop.f32.mrf.mxu0
    %v784 = vadd.f32 %v771, %v783
    %v785 = vpop.f32.mrf.mxu0
    %786 = vdwg.mxu0
    %v787 = vmax.f32 %v784, 0.0
    %v788 = vrot.slane %v787, 4
    %v789 = vadd.f32 %v787, %v788
    %v790 = vrot.slane %v789, 2
    %v791 = vadd.f32 %v789, %v790
    %v792 = vrot.slane %v791, 1
    %v793 = vadd.f32 %v791, %v792
    %v794 = vmul.f32 %v787, %v787
    %v795 = vrot.slane %v794, 4
    %v796 = vadd.f32 %v794, %v795
    %v797 = vrot.slane %v796, 2
    %v798 = vadd.f32 %v796, %v797
    %v799 = vrot.slane %v798, 1
    %v800 = vadd.f32 %v798, %v799
    %v801 = vsel %vm191, %v793, %v800
    %v802 = vmul.f32 %v801, 0.008333334
    %803 = vmatpush.msra.mxu0 %v662
    %804 = vmatpush.msra.mxu0 %v661
    %805 = vmatpush.msra.mxu0 %v660
    %806 = vmatpush.msra.mxu0 %v659
    %807 = vmatpush.msra.mxu0 %v658
    %808 = vmatpush.msra.mxu0 %v657
    %809 = vmatpush.msra.mxu0 %v656
    %810 = vmatpush.msra.mxu0 %v655
    %811 = vmatpush.msra.mxu0 %v654
    %812 = vmatpush.msra.mxu0 %v653
    %813 = vmatpush.msra.mxu0 %v652
    %814 = vmatpush.msra.mxu0 %v651
    %815 = vmatpush.msra.mxu0 %v650
    %816 = vmatpush.msra.mxu0 %v649
    %817 = vmatpush.msra.mxu0 %v648
    %818 = vmatpush.msra.mxu0 %v647
    %819 = vmatmul.f32.gmra.mxu0 %v802
    %v820 = vpop.f32.mrf.mxu0
    %v821 = vadd.f32 0.0, %v820
    %822 = vdwg.mxu0
    %v823 = vmul.f32 %v821, %v821
    %v825 = vrot.slane %v823, 7
    %v827 = vsub.f32 %v821, %v825
    %v828 = vadd.f32 %v827, 1e-05
    %v829 = vrsqrt.pop %v828
    %v830 = vmul.f32 %v829, %v828
    %v831 = vmul.f32 %v830, %v829
    %v832 = vmul.f32 0.5, %v831
    %v833 = vsub.f32 1.5, %v832
    %v834 = vmul.f32 %v829, %v833
    %vm835 = vweird.f32 %v828
    %vm836 = vweird.f32 %v829
    %vm837 = vmor %vm835, %vm836
    %v838 = vsel %vm837, %v829, %v834
    %v839 = vmul.f32 %v645, %v838
    %v841 = vrot.slane %v839, 1
    %v843 = vmul.f32 %v821, %v841
    %v844 = vsub.f32 %v646, %v843
    %v845 = vperm.slane %v839, 1
    %v846 = vmul.f32 %v787, %v845
    %v847 = vperm.slane %v844, 0
    %v848 = vadd.f32 %v846, %v847
    %v849 = vpack.c.bf16 %v848, %v848
    %v850 = vld [vmem:[#allocation5 + $0x200] sm:$0xf]
    %v851 = vld [vmem:[#allocation5 + $0x208] sm:$0xf]
    %v852 = vld [vmem:[#allocation5 + $0x210] sm:$0xf]
    %v853 = vld [vmem:[#allocation5 + $0x218] sm:$0xf]
    %v854 = vld [vmem:[#allocation5 + $0x220] sm:$0xf]
    %v855 = vld [vmem:[#allocation5 + $0x228] sm:$0xf]
    %v856 = vld [vmem:[#allocation5 + $0x230] sm:$0xf]
    %v857 = vld [vmem:[#allocation5 + $0x238] sm:$0xf]
    %v858 = vld [vmem:[#allocation5 + $0x240] sm:$0xf]
    %v859 = vld [vmem:[#allocation5 + $0x248] sm:$0xf]
    %v860 = vld [vmem:[#allocation5 + $0x250] sm:$0xf]
    %v861 = vld [vmem:[#allocation5 + $0x258] sm:$0xf]
    %v862 = vld [vmem:[#allocation5 + $0x260] sm:$0xf]
    %v863 = vld [vmem:[#allocation5 + $0x268] sm:$0xf]
    %v864 = vld [vmem:[#allocation5 + $0x270] sm:$0xf]
    %v865 = vld [vmem:[#allocation5 + $0x278] sm:$0xf]
    %v866 = vld [vmem:[#allocation8 + $0x11] ss:$0 sm:$0xff]
    %v883 = vunpack.c.l.b16 %v850
    %v884 = vunpack.c.l.b16 %v851
    %v885 = vunpack.c.l.b16 %v852
    %v886 = vunpack.c.l.b16 %v853
    %v887 = vunpack.c.l.b16 %v854
    %v888 = vunpack.c.l.b16 %v855
    %v889 = vunpack.c.l.b16 %v856
    %v890 = vunpack.c.l.b16 %v857
    %v891 = vunpack.c.l.b16 %v858
    %v892 = vunpack.c.l.b16 %v859
    %v893 = vunpack.c.l.b16 %v860
    %v894 = vunpack.c.l.b16 %v861
    %v895 = vunpack.c.l.b16 %v862
    %v896 = vunpack.c.l.b16 %v863
    %v897 = vunpack.c.l.b16 %v864
    %v898 = vunpack.c.l.b16 %v865
    %v899 = vpack.c.b16 %v884, %v883
    %v900 = vpack.c.b16 %v886, %v885
    %v901 = vpack.c.b16 %v888, %v887
    %v902 = vpack.c.b16 %v890, %v889
    %v903 = vpack.c.b16 %v892, %v891
    %v904 = vpack.c.b16 %v894, %v893
    %v905 = vpack.c.b16 %v896, %v895
    %v906 = vpack.c.b16 %v898, %v897
    %915 = vmatpush.bf16.msra.mxu0 %v906
    %916 = vmatpush.bf16.msra.mxu0 %v905
    %917 = vmatpush.bf16.msra.mxu0 %v904
    %918 = vmatpush.bf16.msra.mxu0 %v903
    %919 = vmatpush.bf16.msra.mxu0 %v902
    %920 = vmatpush.bf16.msra.mxu0 %v901
    %921 = vmatpush.bf16.msra.mxu0 %v900
    %922 = vmatpush.bf16.msra.mxu0 %v899
    %923 = vmatmul.bf16.gmra.mxu0 %v849
    %v924 = vpop.f32.mrf.mxu0
    %v925 = vadd.f32 %v866, %v924
    %v926 = vpop.f32.mrf.mxu0
    %927 = vdwg.mxu0
    %928 = vst [vmem:[#allocation10] sm:$0xff] %v925
    // Predicated region
    $region34: #{tpu_custom_call.1} parent=1 // pred_check
      _
    $region35: #{tpu_custom_call.1} parent=1 // pred_check_branch
      %930 = sbr.rel (0) target = $region37
    $region36: #{tpu_custom_call.1} parent=1 // pred_region
      %932 = vsyncadd [#allocation4], 0
      %s934 = sshll.u32 [#allocation10], 4
      %s935 = int_to_ptr.vmem [resolvable:$true] %s934
      %s936 = sshll.u32 %s4, 4
      %s937 = int_to_ptr.hbm [resolvable:$true] %s936
      %939 = dma.vmem_to_hbm [thread:$0]  %s935, 128, %s937, [#allocation4]
    $region37: #{tpu_custom_call.1} parent=1 // pred_fallthru
      _
    // Predicated region
    $region38: #{tpu_custom_call.1} parent=1 // pred_check
      _
    $region39: #{tpu_custom_call.1} parent=1 // pred_check_branch
      %941 = sbr.rel (0) target = $region41
    $region40: #{tpu_custom_call.1} parent=1 // pred_region
      %943 = dma.done [#allocation4], 128
    $region41: #{tpu_custom_call.1} parent=1 // pred_fallthru
      _
    %944 = vsyncpa [#allocation3], 1
    %945 = vsyncpa [#allocation6], 1
    %946 = vsyncpa [#allocation9], 1
    %947 = vsyncpa [#allocation4], 1

</llo_original>
